<compile_context>
chip_gen: v6e
topology: v6e:2x2x1
jax: 0.10.0
libtpu: 0.0.40
codegen_flags: <defaults>
</compile_context>

<pallas_src>
import functools

import jax
import jax.numpy as jnp
from jax import lax
from jax.experimental import pallas as pl
from jax.experimental.pallas import tpu as pltpu


_BN_EPS = 1e-5


def _pad_to(x, m):
    return ((x + m - 1) // m) * m


def _vmem_limit_bytes():
    """Generation-aware VMEM limit (v5e/v6e: 128 MiB phys, v7x: 64 MiB phys)."""
    cap = 128 * 1024 * 1024
    try:
        info = pltpu.get_tpu_info()
        cap = int(getattr(info, "vmem_capacity_bytes", cap))
    except Exception:
        pass
    return max(32 * 1024 * 1024, min(cap * 3 // 4, 96 * 1024 * 1024))


# ----------------- plain-JAX glue: sampling / grouping (data-dependent gathers) ---

def farthest_point_sample(xyz, npoint):
    """xyz: [B, N, 3] -> centroid indices [B, npoint] (deterministic start index 0)."""
    B, N, _ = xyz.shape
    farthest = jnp.zeros((B,), dtype=jnp.int32)
    distance = jnp.full((B, N), 1e10, dtype=jnp.float32)
    centroids = jnp.zeros((B, npoint), dtype=jnp.int32)

    def body(i, carry):
        centroids, distance, farthest = carry
        centroids = centroids.at[:, i].set(farthest)
        centroid = jnp.take_along_axis(xyz, farthest[:, None, None], axis=1)  # [B,1,3]
        dist = jnp.sum((xyz - centroid) ** 2, axis=-1)
        distance = jnp.minimum(distance, dist)
        farthest = jnp.argmax(distance, axis=-1).astype(jnp.int32)
        return centroids, distance, farthest

    centroids, _, _ = lax.fori_loop(0, npoint, body, (centroids, distance, farthest))
    return centroids


def index_points(points, idx):
    """points: [B, N, C], idx: [B, S] or [B, S, K] -> gathered [B, S(, K), C]."""
    B = points.shape[0]
    C = points.shape[-1]
    flat = idx.reshape(B, -1)
    out = jnp.take_along_axis(points, flat[..., None], axis=1)
    return out.reshape((B,) + idx.shape[1:] + (C,))


def ball_query(xyz, new_xyz, radius, nsample):
    """xyz: [B, N, 3], new_xyz: [B, M, 3] -> group_idx [B, M, nsample]."""
    B, N, _ = xyz.shape
    sqrdists = jnp.sum((new_xyz[:, :, None, :] - xyz[:, None, :, :]) ** 2, axis=-1)  # [B,M,N]
    idx = jnp.arange(N, dtype=jnp.int32)[None, None, :]
    cand = jnp.where(sqrdists > radius ** 2, jnp.int32(N), idx)          # invalid -> N
    top_neg, _ = lax.top_k(-cand.astype(jnp.float32), nsample)           # exact for N < 2^24
    group_idx = (-top_neg).astype(jnp.int32)                             # ascending indices
    group_idx = jnp.where(group_idx == N, 0, group_idx)                  # clamp-to-0 (as ref)
    return group_idx


# ----------------- Pallas kernel -----------------

def _layer_kernel(is_first, is_last, need_mask, r_real, first_masked_tile, tg, s, *refs):
    """One MLP layer over a tile of tg groups x s samples.

    is_first : input is the raw grouped tensor (no bn/relu on the input).
    is_last  : emit per-group max/min of y over the nsample axis instead of y itself.
    Always emits per-tile partial BN statistics (sum / sum-of-squares) of y.
    """
    if is_first:
        x_ref, w_ref, b_ref = refs[0], refs[1], refs[2]
        outs = refs[3:]
        xin = x_ref[...]                                            # bf16 [tr, cin]
    else:
        y_prev_ref, sc_ref, sh_ref, w_ref, b_ref = refs[:5]
        outs = refs[5:]
        xf = y_prev_ref[...].astype(jnp.float32)                    # bf16 -> f32
        xin = jnp.maximum(xf * sc_ref[...] + sh_ref[...], 0.0).astype(jnp.bfloat16)

    # MXU matmul, f32 accumulation.
    y = jnp.dot(xin, w_ref[...], preferred_element_type=jnp.float32) + b_ref[...]
    tr = y.shape[0]
    cout = y.shape[1]

    if is_last:
        ymax_ref, ymin_ref, stats_ref = outs
        y3 = y.reshape(tg, s, cout)
        ymax_ref[...] = jnp.max(y3, axis=1)
        ymin_ref[...] = jnp.min(y3, axis=1)
    else:
        y_ref, stats_ref = outs
        y_ref[...] = y.astype(jnp.bfloat16)                         # bf16 inter-layer stream

    def write_stats(yv):
        # rows 2..7 of the stats block are intentionally left unwritten (never read).
        stats_ref[0:1, :] = jnp.sum(yv, axis=0, keepdims=True)
        stats_ref[1:2, :] = jnp.sum(yv * y, axis=0, keepdims=True)

    if need_mask:
        pid = pl.program_id(0)

        @pl.when(pid >= first_masked_tile)                          # only padded-row tiles
        def _():
            row = pid * tr + lax.broadcasted_iota(jnp.int32, (tr, 1), 0)
            write_stats(jnp.where(row < r_real, y, 0.0))

        @pl.when(pid < first_masked_tile)                           # unmasked fast path
        def _():
            write_stats(y)
    else:
        write_stats(y)


# ----------------- pallas_call wrapper -----------------

def _layer_call(y_prev, scale, shift, Wp, bp, *, is_first, is_last, tg, s, tr,
                num_tiles, r_real, need_mask, first_masked_tile, vmem_limit):
    cprev = y_prev.shape[1]
    cout = Wp.shape[1]
    kernel = functools.partial(_layer_kernel, is_first, is_last, need_mask,
                               r_real, first_masked_tile, tg, s)

    x_spec = pl.BlockSpec((tr, cprev), lambda i: (i, 0))
    w_spec = pl.BlockSpec((cprev, cout), lambda i: (0, 0))   # VMEM-resident across tiles
    b_spec = pl.BlockSpec((1, cout), lambda i: (0, 0))
    if is_first:
        in_specs = [x_spec, w_spec, b_spec]
        args = (y_prev, Wp, bp)
    else:
        sc_spec = pl.BlockSpec((1, cprev), lambda i: (0, 0))
        sh_spec = pl.BlockSpec((1, cprev), lambda i: (0, 0))
        in_specs = [x_spec, sc_spec, sh_spec, w_spec, b_spec]
        args = (y_prev, scale, shift, Wp, bp)

    stats_shape = jax.ShapeDtypeStruct((num_tiles * 8, cout), jnp.float32)
    stats_spec = pl.BlockSpec((8, cout), lambda i: (i, 0))
    if is_last:
        out_shape = (jax.ShapeDtypeStruct((num_tiles * tg, cout), jnp.float32),
                     jax.ShapeDtypeStruct((num_tiles * tg, cout), jnp.float32),
                     stats_shape)
        out_specs = (pl.BlockSpec((tg, cout), lambda i: (i, 0)),
                     pl.BlockSpec((tg, cout), lambda i: (i, 0)),
                     stats_spec)
    else:
        out_shape = (jax.ShapeDtypeStruct((num_tiles * tr, cout), jnp.bfloat16),
                     stats_shape)
        out_specs = (pl.BlockSpec((tr, cout), lambda i: (i, 0)),
                     stats_spec)

    return pl.pallas_call(
        kernel,
        out_shape=out_shape,
        grid=(num_tiles,),
        in_specs=in_specs,
        out_specs=out_specs,
        compiler_params=pltpu.CompilerParams(
            dimension_semantics=("parallel",),
            vmem_limit_bytes=vmem_limit),
    )(*args)


def _finalize_bn(stats, gamma_pad, beta_pad, count):
    """Reduce per-tile partial stats -> per-channel BN scale/shift (tiny, f32, in XLA)."""
    s = stats.reshape(-1, 8, stats.shape[-1])
    psum = jnp.sum(s[:, 0, :], axis=0)
    psumsq = jnp.sum(s[:, 1, :], axis=0)
    mean = psum / count
    var = jnp.maximum(psumsq / count - mean * mean, 0.0)      # biased var (PyTorch BN)
    inv = lax.rsqrt(var + _BN_EPS)
    scale = gamma_pad * inv
    shift = beta_pad - mean * scale
    return scale.reshape(1, -1), shift.reshape(1, -1)


# ----------------- tile sizing -----------------

def _tile_vmem_bytes(tg, S, layer_dims):
    """Conservative per-tile VMEM footprint estimate (double-buffered streams)."""
    tr = tg * S
    worst = 0
    for cprev, cout in layer_dims:
        b = 2 * tr * cprev * 2          # input stream, bf16, double-buffered
        b += 2 * tr * cout * 2          # y output stream, bf16, double-buffered
        b += tr * cout * 4              # f32 accumulator / temporaries
        b += 2 * cprev * cout * 2       # weights (bf16), nominally double-buffered
        b += 8 * cout * 4 * 4           # bias / scale / shift / stats blocks (tiny)
        worst = max(worst, b)
    return worst


def _choose_tg(S, G, layer_dims, budget, target_rows):
    tg_cap = _pad_to(G, 16)
    tg = max(16, min(tg_cap, (max(target_rows // S, 1)) // 16 * 16))
    while tg > 16 and _tile_vmem_bytes(tg, S, layer_dims) > budget:
        tg = max(16, (tg // 2) // 16 * 16)
    return tg


# ----------------- fused MLP + BN + ReLU + max over nsample -----------------

def set_abstraction_mlp(grouped, params, *, target_rows=4096):
    """grouped: [B, M, S, Cin] f32; params: list of (W [Cin,Cout], b, gamma, beta).

    Conv2d(1x1) + BatchNorm2d (training-mode batch statistics) + ReLU per layer,
    then max over the nsample axis.  Returns [B, M, mlp[-1]] f32.
    """
    B, M, S, Cin = grouped.shape
    G = B * M
    R = G * S
    L = len(params)

    # Channel padding: layer-0 input only to a multiple of 8 (tiny Cin), hidden layers to
    # 128 for lane-dense matmul operands and unmasked stores.
    cin8 = _pad_to(Cin, 8)
    couts = [W.shape[1] for (W, _, _, _) in params]
    cout_pads = [_pad_to(c, 128) for c in couts]
    layer_dims = []
    prev = cin8
    for cp in cout_pads:
        layer_dims.append((prev, cp))
        prev = cp

    vmem_limit = _vmem_limit_bytes()
    budget = int(vmem_limit * 0.6)
    # Point-axis tile: tg groups (tg*S rows) per grid step; tg multiple of 16 so bf16
    # (16-sublane) and f32 (8-sublane) blocks are both layout-aligned.
    tg = _choose_tg(S, G, layer_dims, budget, target_rows)
    g_pad = _pad_to(G, tg)
    num_tiles = g_pad // tg
    if num_tiles > 1 and num_tiles % 2 == 1:   # even tile count for v7x's 2 TensorCores
        num_tiles += 1
        g_pad = num_tiles * tg
    tr = tg * S
    r_pad = g_pad * S
    need_mask = g_pad != G                      # padded groups must not leak into BN stats
    first_masked_tile = G // tg                 # first grid tile containing padded rows
    count = jnp.float32(R)

    # bf16 layer-0 input (MXU operand dtype; halves the HBM read of the S-duplicated tensor).
    x = grouped.reshape(R, Cin).astype(jnp.float32)
    x = jnp.pad(x, ((0, r_pad - R), (0, cin8 - Cin))).astype(jnp.bfloat16)

    y = x
    scale = shift = None
    ymax = ymin = None
    for li, (W, bias, gamma, beta) in enumerate(params):
        is_first = li == 0
        is_last = li == L - 1
        cprev_pad, cout_pad = layer_dims[li]
        c_in, c_out = W.shape

        Wp = jnp.zeros((cprev_pad, cout_pad), jnp.float32)
        Wp = Wp.at[:c_in, :c_out].set(W.astype(jnp.float32)).astype(jnp.bfloat16)
        bp = jnp.zeros((1, cout_pad), jnp.float32).at[0, :c_out].set(bias)
        gp = jnp.zeros((cout_pad,), jnp.float32).at[:c_out].set(gamma)   # 0 on padded lanes
        btp = jnp.zeros((cout_pad,), jnp.float32).at[:c_out].set(beta)

        outs = _layer_call(y, scale, shift, Wp, bp,
                           is_first=is_first, is_last=is_last,
                           tg=tg, s=S, tr=tr, num_tiles=num_tiles, r_real=R,
                           need_mask=need_mask, first_masked_tile=first_masked_tile,
                           vmem_limit=vmem_limit)
        if is_last:
            ymax, ymin, stats = outs
        else:
            y, stats = outs
        scale, shift = _finalize_bn(stats, gp, btp, count)

    # Final bn + relu + max over nsample, folded: bn+relu is per-channel monotone affine,
    # so only the per-group max (scale>=0) / min (scale<0) of y_L is needed (tiny [G, C]).
    pre = jnp.where(scale >= 0.0, scale * ymax + shift, scale * ymin + shift)
    out = jnp.maximum(pre, 0.0)
    return out[:G, :couts[-1]].reshape(B, M, couts[-1])


# ----------------- full SetAbstraction forward -----------------

def set_abstraction_forward(xyz, points, npoint, radius, nsample, params):
    """
    xyz:    [B, N, 3]
    points: [B, N, Cp] or None
    Returns: new_xyz [B, npoint, 3], new_points [B, npoint, mlp[-1]]
    """
    idx = farthest_point_sample(xyz, npoint)                       # [B, npoint]
    new_xyz = index_points(xyz, idx)                               # [B, npoint, 3]
    group_idx = ball_query(xyz, new_xyz, radius, nsample)          # [B, npoint, nsample]
    grouped_xyz = index_points(xyz, group_idx) - new_xyz[:, :, None, :]
    if points is not None:
        grouped_points = jnp.concatenate(
            [grouped_xyz, index_points(points, group_idx)], axis=-1)
    else:
        grouped_points = grouped_xyz                               # [B, npoint, nsample, Cin]
    # TODO(synk): fuse this gather into the first layer call (scalar-prefetched group_idx +
    # manual per-group DMA) so the nsample-duplicated grouped tensor never round-trips HBM.
    new_points = set_abstraction_mlp(grouped_points.astype(jnp.float32), params)
    return new_xyz, new_points


# ----------------- pure-JAX reference of the MLP path (for the smoke test) -----------------

def _mlp_reference(grouped, params):
    x = grouped.astype(jnp.float32)                      # [B, M, S, C]
    for (W, b, gamma, beta) in params:
        y = jnp.einsum('bmsc,cd->bmsd', x, W) + b
        mean = jnp.mean(y, axis=(0, 1, 2))
        var = jnp.mean((y - mean) ** 2, axis=(0, 1, 2))
        y = (y - mean) * lax.rsqrt(var + _BN_EPS) * gamma + beta
        x = jnp.maximum(y, 0.0)
    return jnp.max(x, axis=2)                            # [B, M, Cout]


# ----------------- example / smoke test -----------------

if __name__ == "__main__":
    key = jax.random.PRNGKey(0)

    B, N, Cp = 2, 32, 4
    npoint, radius, nsample = 8, 0.5, 8
    mlp = [16, 32]
    in_channel = Cp + 3  # grouped_xyz (3) concat point features (Cp)

    k_xyz, k_pts, k_w = jax.random.split(key, 3)
    xyz = jax.random.uniform(k_xyz, (B, N, 3), dtype=jnp.float32)
    points = jax.random.normal(k_pts, (B, N, Cp), dtype=jnp.float32)

    # Deterministic parameter init (shapes follow Conv2d(last, out, 1) + BatchNorm2d(out)).
    params = []
    last = in_channel
    for out_c in mlp:
        k_w, kW, kb = jax.random.split(k_w, 3)
        W = jax.random.normal(kW, (last, out_c), dtype=jnp.float32) * 0.1  # conv weight^T
        b = jax.random.normal(kb, (out_c,), dtype=jnp.float32) * 0.1       # conv bias
        gamma = jnp.ones((out_c,), dtype=jnp.float32)                      # BN weight
        beta = jnp.zeros((out_c,), dtype=jnp.float32)                      # BN bias
        params.append((W, b, gamma, beta))
        last = out_c

    new_xyz, new_points = set_abstraction_forward(
        xyz, points, npoint, radius, nsample, params)
    jax.block_until_ready((new_xyz, new_points))

    # Correctness check against a pure-JAX (f32) reference of the same forward.
    ref_idx = farthest_point_sample(xyz, npoint)
    ref_new_xyz = index_points(xyz, ref_idx)
    ref_gidx = ball_query(xyz, ref_new_xyz, radius, nsample)
    ref_gxyz = index_points(xyz, ref_gidx) - ref_new_xyz[:, :, None, :]
    ref_grouped = jnp.concatenate([ref_gxyz, index_points(points, ref_gidx)], axis=-1)
    ref_points = _mlp_reference(ref_grouped, params)

    assert new_xyz.shape == (B, npoint, 3)
    assert new_points.shape == (B, npoint, mlp[-1])
    assert bool(jnp.all(jnp.isfinite(new_points)))
    err = float(jnp.max(jnp.abs(new_points - ref_points)))
    assert err < 1e-1, f"max abs error vs reference: {err}"
    print("KERNEL_OK")
</pallas_src>

<mosaic_0001>
module attributes {stable_mosaic.version = 11 : i64} {
  func.func @_layer_kernel(%arg0: i32, %arg1: memref<128x8xbf16, #tpu.memory_space<vmem>>, %arg2: memref<8x128xbf16, #tpu.memory_space<vmem>>, %arg3: memref<1x128xf32, #tpu.memory_space<vmem>>, %arg4: memref<128x128xbf16, #tpu.memory_space<vmem>>, %arg5: memref<8x128xf32, #tpu.memory_space<vmem>>) attributes {dimension_semantics = [#tpu.dimension_semantics<parallel>], iteration_bounds = array<i64: 1>, scalar_prefetch = 0 : i64, scratch_operands = 0 : i64, tpu.core_type = #tpu.core_type<tc>, window_params = [{transform_indices = @transform_0, window_bounds = array<i64: 128, 8>}, {pipeline_mode = #tpu.pipeline_mode<synchronous>, transform_indices = @transform_1, window_bounds = array<i64: 8, 128>}, {pipeline_mode = #tpu.pipeline_mode<synchronous>, transform_indices = @transform_2, window_bounds = array<i64: 1, 128>}, {transform_indices = @transform_3, window_bounds = array<i64: 128, 128>}, {transform_indices = @transform_4, window_bounds = array<i64: 8, 128>}]} {
    %c0 = arith.constant 0 : index
    %c0_0 = arith.constant 0 : index
    %0 = vector.load %arg1[%c0, %c0_0] : memref<128x8xbf16, #tpu.memory_space<vmem>>, vector<128x8xbf16>
    %c0_1 = arith.constant 0 : index
    %c0_2 = arith.constant 0 : index
    %1 = vector.load %arg2[%c0_1, %c0_2] : memref<8x128xbf16, #tpu.memory_space<vmem>>, vector<8x128xbf16>
    %cst = arith.constant dense<0.000000e+00> : vector<128x128xf32>
    %2 = tpu.matmul %0, %1, %cst {dimension_numbers = #tpu.dot_dimension_numbers<[1], [0], [0], [1], [0, 0, 1, 1], [], []>} : vector<128x8xbf16>, vector<8x128xbf16>, vector<128x128xf32> -> vector<128x128xf32>
    %c0_3 = arith.constant 0 : index
    %c0_4 = arith.constant 0 : index
    %3 = vector.load %arg3[%c0_3, %c0_4] : memref<1x128xf32, #tpu.memory_space<vmem>>, vector<1x128xf32>
    %4 = vector.broadcast %3 : vector<1x128xf32> to vector<128x128xf32>
    %5 = arith.addf %2, %4 : vector<128x128xf32>
    %6 = arith.truncf %5 : vector<128x128xf32> to vector<128x128xbf16>
    %c0_5 = arith.constant 0 : index
    %c0_6 = arith.constant 0 : index
    %7 = vector.load %arg4[%c0_5, %c0_6] : memref<128x128xbf16, #tpu.memory_space<vmem>>, vector<128x128xbf16>
    tpu.vector_store %arg4[%c0_5, %c0_6], %6 {strides = array<i32>} : memref<128x128xbf16, #tpu.memory_space<vmem>>, vector<128x128xbf16>,
    %cst_7 = arith.constant dense<0.000000e+00> : vector<128xf32>
    %8 = vector.multi_reduction <add>, %5, %cst_7 [0] : vector<128x128xf32> to vector<128xf32>
    %9 = vector.shape_cast %8 : vector<128xf32> to vector<1x128xf32>
    %c0_8 = arith.constant 0 : index
    %c0_9 = arith.constant 0 : index
    %10 = vector.load %arg5[%c0_8, %c0_9] : memref<8x128xf32, #tpu.memory_space<vmem>>, vector<1x128xf32>
    tpu.vector_store %arg5[%c0_8, %c0_9], %9 {strides = array<i32>} : memref<8x128xf32, #tpu.memory_space<vmem>>, vector<1x128xf32>,
    %11 = arith.mulf %5, %5 : vector<128x128xf32>
    %cst_10 = arith.constant dense<0.000000e+00> : vector<128xf32>
    %12 = vector.multi_reduction <add>, %11, %cst_10 [0] : vector<128x128xf32> to vector<128xf32>
    %13 = vector.shape_cast %12 : vector<128xf32> to vector<1x128xf32>
    %c1 = arith.constant 1 : index
    %c0_11 = arith.constant 0 : index
    %14 = vector.load %arg5[%c1, %c0_11] : memref<8x128xf32, #tpu.memory_space<vmem>>, vector<1x128xf32>
    tpu.vector_store %arg5[%c1, %c0_11], %13 {strides = array<i32>} : memref<8x128xf32, #tpu.memory_space<vmem>>, vector<1x128xf32>,
    return
  }
  func.func @transform_0(%arg0: i32) -> (i32, i32) {
    %c0_i32 = arith.constant 0 : i32
    %c0_i32_0 = arith.constant 0 : i32
    return %arg0, %c0_i32 : i32, i32
  }
  func.func @transform_1(%arg0: i32) -> (i32, i32) {
    %c0_i32 = arith.constant 0 : i32
    %c0_i32_0 = arith.constant 0 : i32
    %c0_i32_1 = arith.constant 0 : i32
    return %c0_i32, %c0_i32_0 : i32, i32
  }
  func.func @transform_2(%arg0: i32) -> (i32, i32) {
    %c0_i32 = arith.constant 0 : i32
    %c0_i32_0 = arith.constant 0 : i32
    %c0_i32_1 = arith.constant 0 : i32
    return %c0_i32, %c0_i32_0 : i32, i32
  }
  func.func @transform_3(%arg0: i32) -> (i32, i32) {
    %c0_i32 = arith.constant 0 : i32
    %c0_i32_0 = arith.constant 0 : i32
    return %arg0, %c0_i32 : i32, i32
  }
  func.func @transform_4(%arg0: i32) -> (i32, i32) {
    %c0_i32 = arith.constant 0 : i32
    %c0_i32_0 = arith.constant 0 : i32
    return %arg0, %c0_i32 : i32, i32
  }
}

</mosaic_0001>

<llo_original>
// kernel: tpu_custom_call.1
$region0: #{tpu_custom_call.1}
  #allocation0 [shape = 'u32[]', space=smem, size = 0x4, offset = 0x4, fixed_abs, tag = 'smem constant byte address 0x4 - core index']
  #allocation1 [shape = 'u32[144,128]{1,0:T(1,128)}', space=vmem, size = 0x12000, scoped, tag = 'internal scratch']
  %s0 = inlined_call_operand.vmem [shape: bf16[128,8], index: 0, kind: input, shape index: {}]
  %s1 = inlined_call_operand.vmem [shape: bf16[8,128], index: 1, kind: input, shape index: {}]
  %s2 = inlined_call_operand.vmem [shape: f32[1,128], index: 2, kind: input, shape index: {}]
  %s3 = inlined_call_operand.hbm [shape: bf16[128,128], index: 3, kind: output, shape index: {0}]
  %s4 = inlined_call_operand.hbm [shape: f32[8,128], index: 4, kind: output, shape index: {1}]
  %5 = xla_tuple %s3, %s4
  %s6 = sld [smem:[#allocation0]]
  $region30: #{tpu_custom_call.1} parent=0
    _
  %s8 = ssub.s32 1, %s6
  %s9 = scalar_select 0, %s8, %s6
  $region1: #{tpu_custom_call.1} parent=0
    #allocation2 [shape = 'u8[32768]{0}', space=vmem, size = 0x8000, scoped, tag = 'output window, operand 0, single buffered']
    #allocation3 [shape = 's32[1]{0}', space=sflag, size = 0x4, scoped, tag = 'scoped memory for tpu_custom_call.1']
    #allocation4 [shape = 'u8[4096]{0}', space=vmem, size = 0x1000, scoped, tag = 'output window, operand 1, single buffered']
    #allocation5 [shape = 's32[1]{0}', space=sflag, size = 0x4, scoped, tag = 'scoped memory for tpu_custom_call.1']
    %10 = vsyncpa [#allocation3], 0
    %11 = vsyncpa [#allocation5], 0
    // Predicated region
    $region2: #{tpu_custom_call.1} parent=1 // pred_check
      _
    $region3: #{tpu_custom_call.1} parent=1 // pred_check_branch
      %13 = sbr.rel (0) target = $region5
    $region4: #{tpu_custom_call.1} parent=1 // pred_region
      _
    $region5: #{tpu_custom_call.1} parent=1 // pred_fallthru
      _
    // Predicated region
    $region6: #{tpu_custom_call.1} parent=1 // pred_check
      _
    $region7: #{tpu_custom_call.1} parent=1 // pred_check_branch
      %15 = sbr.rel (0) target = $region9
    $region8: #{tpu_custom_call.1} parent=1 // pred_region
      _
    $region9: #{tpu_custom_call.1} parent=1 // pred_fallthru
      _
    // Predicated region
    $region10: #{tpu_custom_call.1} parent=1 // pred_check
      _
    $region11: #{tpu_custom_call.1} parent=1 // pred_check_branch
      %17 = sbr.rel (0) target = $region13
    $region12: #{tpu_custom_call.1} parent=1 // pred_region
      _
    $region13: #{tpu_custom_call.1} parent=1 // pred_fallthru
      _
    %v19 = vld [vmem:[%s0] sm:$0xf]
    %v20 = vld [vmem:[%s0 + $0x4] sm:$0xf]
    %v21 = vld [vmem:[%s0 + $0x8] sm:$0xf]
    %v22 = vld [vmem:[%s0 + $0xc] sm:$0xf]
    %v23 = vld [vmem:[%s0 + $0x10] sm:$0xf]
    %v24 = vld [vmem:[%s0 + $0x14] sm:$0xf]
    %v25 = vld [vmem:[%s0 + $0x18] sm:$0xf]
    %v26 = vld [vmem:[%s0 + $0x1c] sm:$0xf]
    %v27 = vld [vmem:[%s0 + $0x20] sm:$0xf]
    %v28 = vld [vmem:[%s0 + $0x24] sm:$0xf]
    %v29 = vld [vmem:[%s0 + $0x28] sm:$0xf]
    %v30 = vld [vmem:[%s0 + $0x2c] sm:$0xf]
    %v31 = vld [vmem:[%s0 + $0x30] sm:$0xf]
    %v32 = vld [vmem:[%s0 + $0x34] sm:$0xf]
    %v33 = vld [vmem:[%s0 + $0x38] sm:$0xf]
    %v34 = vld [vmem:[%s0 + $0x3c] sm:$0xf]
    %v35 = vld [vmem:[%s1] sm:$0xf]
    %v36 = vld [vmem:[%s2] sm:$0x1]
    %v38 = vlaneseq
    %v39 = vshrl.u32 %v38, 7
    %v40 = vsub.s32 0, %v39
    %v41 = vrot.slane %v36, %v40
    %v59 = vunpack.c.l.b16 %v19
    %v60 = vunpack.c.l.b16 %v20
    %v61 = vunpack.c.l.b16 %v21
    %v62 = vunpack.c.l.b16 %v22
    %v63 = vunpack.c.l.b16 %v23
    %v64 = vunpack.c.l.b16 %v24
    %v65 = vunpack.c.l.b16 %v25
    %v66 = vunpack.c.l.b16 %v26
    %v67 = vunpack.c.l.b16 %v27
    %v68 = vunpack.c.l.b16 %v28
    %v69 = vunpack.c.l.b16 %v29
    %v70 = vunpack.c.l.b16 %v30
    %v71 = vunpack.c.l.b16 %v31
    %v72 = vunpack.c.l.b16 %v32
    %v73 = vunpack.c.l.b16 %v33
    %v74 = vunpack.c.l.b16 %v34
    %v75 = vpack.c.b16 %v60, %v59
    %v76 = vpack.c.b16 %v62, %v61
    %v77 = vpack.c.b16 %v64, %v63
    %v78 = vpack.c.b16 %v66, %v65
    %v79 = vpack.c.b16 %v68, %v67
    %v80 = vpack.c.b16 %v70, %v69
    %v81 = vpack.c.b16 %v72, %v71
    %v82 = vpack.c.b16 %v74, %v73
    %vm83 = vcmask 64512
    %v85 = vsel %vm83, %v75, 0
    %v88 = vsel %vm83, %v76, 0
    %v91 = vsel %vm83, %v77, 0
    %v94 = vsel %vm83, %v78, 0
    %v97 = vsel %vm83, %v79, 0
    %v100 = vsel %vm83, %v80, 0
    %v103 = vsel %vm83, %v81, 0
    %v106 = vsel %vm83, %v82, 0
    %vm108 = vcmask 1043456
    %v110 = vsel %vm108, %v35, 0
    %112 = vmatprep.subr.bf16.mxu0 0
    %113 = vmatpush1.bf16.msra.mxu0 0
    %114 = vmatprep.subr.bf16.mxu0 0
    %115 = vmatpush1.bf16.msra.mxu0 0
    %116 = vmatprep.subr.bf16.mxu0 0
    %117 = vmatpush1.bf16.msra.mxu0 0
    %118 = vmatprep.subr.bf16.mxu0 0
    %119 = vmatpush1.bf16.msra.mxu0 0
    %120 = vmatprep.subr.bf16.mxu0 0
    %121 = vmatpush1.bf16.msra.mxu0 0
    %122 = vmatprep.subr.bf16.mxu0 0
    %123 = vmatpush1.bf16.msra.mxu0 0
    %124 = vmatprep.subr.bf16.mxu0 0
    %125 = vmatpush1.bf16.msra.mxu0 0
    %126 = vmatprep.subr.bf16.mxu0 0
    %127 = vmatpush1.bf16.msra.mxu0 %v110
    %128 = vmatprep.subr.bf16.mxu0 0
    %129 = vmatpush2.bf16.msra.mxu0 0
    %130 = vmatprep.subr.bf16.mxu0 0
    %131 = vmatpush2.bf16.msra.mxu0 0
    %132 = vmatprep.subr.bf16.mxu0 0
    %133 = vmatpush2.bf16.msra.mxu0 0
    %134 = vmatprep.subr.bf16.mxu0 0
    %135 = vmatpush2.bf16.msra.mxu0 0
    %136 = vmatprep.subr.bf16.mxu0 0
    %137 = vmatpush2.bf16.msra.mxu0 0
    %138 = vmatprep.subr.bf16.mxu0 0
    %139 = vmatpush2.bf16.msra.mxu0 0
    %140 = vmatprep.subr.bf16.mxu0 0
    %141 = vmatpush2.bf16.msra.mxu0 0
    %142 = vmatprep.subr.bf16.mxu0 0
    %143 = vmatpush2.bf16.msra.mxu0 0
    %144 = vmatprep.mubr.bf16.mxu0 0
    %145 = vmatmul.mubr.bf16.gmra.mxu0 %v85
    %v146 = vpop.f32.mrf.mxu0
    %v147 = vadd.f32 %v41, %v146
    %v148 = vpop.f32.mrf.mxu0
    %v149 = vpop.f32.mrf.mxu0
    %v150 = vadd.f32 %v41, %v149
    %v151 = vpop.f32.mrf.mxu0
    %152 = vmatprep.mubr.bf16.mxu0 0
    %153 = vmatmul.mubr.bf16.gmra.mxu0 %v88
    %v154 = vpop.f32.mrf.mxu0
    %v155 = vadd.f32 %v41, %v154
    %v156 = vpop.f32.mrf.mxu0
    %v157 = vpop.f32.mrf.mxu0
    %v158 = vadd.f32 %v41, %v157
    %v159 = vpop.f32.mrf.mxu0
    %160 = vmatprep.mubr.bf16.mxu0 0
    %161 = vmatmul.mubr.bf16.gmra.mxu0 %v91
    %v162 = vpop.f32.mrf.mxu0
    %v163 = vadd.f32 %v41, %v162
    %v164 = vpop.f32.mrf.mxu0
    %v165 = vpop.f32.mrf.mxu0
    %v166 = vadd.f32 %v41, %v165
    %v167 = vpop.f32.mrf.mxu0
    %168 = vmatprep.mubr.bf16.mxu0 0
    %169 = vmatmul.mubr.bf16.gmra.mxu0 %v94
    %v170 = vpop.f32.mrf.mxu0
    %v171 = vadd.f32 %v41, %v170
    %v172 = vpop.f32.mrf.mxu0
    %v173 = vpop.f32.mrf.mxu0
    %v174 = vadd.f32 %v41, %v173
    %v175 = vpop.f32.mrf.mxu0
    %176 = vmatprep.mubr.bf16.mxu0 0
    %177 = vmatmul.mubr.bf16.gmra.mxu0 %v97
    %v178 = vpop.f32.mrf.mxu0
    %v179 = vadd.f32 %v41, %v178
    %v180 = vpop.f32.mrf.mxu0
    %v181 = vpop.f32.mrf.mxu0
    %v182 = vadd.f32 %v41, %v181
    %v183 = vpop.f32.mrf.mxu0
    %184 = vmatprep.mubr.bf16.mxu0 0
    %185 = vmatmul.mubr.bf16.gmra.mxu0 %v100
    %v186 = vpop.f32.mrf.mxu0
    %v187 = vadd.f32 %v41, %v186
    %v188 = vpop.f32.mrf.mxu0
    %v189 = vpop.f32.mrf.mxu0
    %v190 = vadd.f32 %v41, %v189
    %v191 = vpop.f32.mrf.mxu0
    %192 = vmatprep.mubr.bf16.mxu0 0
    %193 = vmatmul.mubr.bf16.gmra.mxu0 %v103
    %v194 = vpop.f32.mrf.mxu0
    %v195 = vadd.f32 %v41, %v194
    %v196 = vpop.f32.mrf.mxu0
    %v197 = vpop.f32.mrf.mxu0
    %v198 = vadd.f32 %v41, %v197
    %v199 = vpop.f32.mrf.mxu0
    %200 = vmatprep.mubr.bf16.mxu0 0
    %201 = vmatmul.mubr.bf16.gmra.mxu0 %v106
    %v202 = vpop.f32.mrf.mxu0
    %v203 = vadd.f32 %v41, %v202
    %v204 = vpop.f32.mrf.mxu0
    %v205 = vpop.f32.mrf.mxu0
    %v206 = vadd.f32 %v41, %v205
    %v207 = vpop.f32.mrf.mxu0
    %208 = vdwg.mxu0
    %v209 = vpack.c.bf16 %v150, %v147
    %v210 = vpack.c.bf16 %v158, %v155
    %v211 = vpack.c.bf16 %v166, %v163
    %v212 = vpack.c.bf16 %v174, %v171
    %v213 = vpack.c.bf16 %v182, %v179
    %v214 = vpack.c.bf16 %v190, %v187
    %v215 = vpack.c.bf16 %v198, %v195
    %v216 = vpack.c.bf16 %v206, %v203
    %v225 = vunpack.c.l.b16 %v209
    %v226 = vunpack.c.h.b16 %v209
    %v227 = vunpack.c.l.b16 %v210
    %v228 = vunpack.c.h.b16 %v210
    %v229 = vunpack.c.l.b16 %v211
    %v230 = vunpack.c.h.b16 %v211
    %v231 = vunpack.c.l.b16 %v212
    %v232 = vunpack.c.h.b16 %v212
    %v233 = vunpack.c.l.b16 %v213
    %v234 = vunpack.c.h.b16 %v213
    %v235 = vunpack.c.l.b16 %v214
    %v236 = vunpack.c.h.b16 %v214
    %v237 = vunpack.c.l.b16 %v215
    %v238 = vunpack.c.h.b16 %v215
    %v239 = vunpack.c.l.b16 %v216
    %v240 = vunpack.c.h.b16 %v216
    %v241 = vpack.c.b16 %v225, %v225
    %v242 = vpack.c.b16 %v226, %v226
    %v243 = vpack.c.b16 %v227, %v227
    %v244 = vpack.c.b16 %v228, %v228
    %v245 = vpack.c.b16 %v229, %v229
    %v246 = vpack.c.b16 %v230, %v230
    %v247 = vpack.c.b16 %v231, %v231
    %v248 = vpack.c.b16 %v232, %v232
    %v249 = vpack.c.b16 %v233, %v233
    %v250 = vpack.c.b16 %v234, %v234
    %v251 = vpack.c.b16 %v235, %v235
    %v252 = vpack.c.b16 %v236, %v236
    %v253 = vpack.c.b16 %v237, %v237
    %v254 = vpack.c.b16 %v238, %v238
    %v255 = vpack.c.b16 %v239, %v239
    %v256 = vpack.c.b16 %v240, %v240
    %273 = vst [vmem:[#allocation2] sm:$0xf] %v241
    %274 = vst [vmem:[#allocation2 + $0x4] sm:$0xf] %v242
    %275 = vst [vmem:[#allocation2 + $0x8] sm:$0xf] %v243
    %276 = vst [vmem:[#allocation2 + $0xc] sm:$0xf] %v244
    %277 = vst [vmem:[#allocation2 + $0x10] sm:$0xf] %v245
    %278 = vst [vmem:[#allocation2 + $0x14] sm:$0xf] %v246
    %279 = vst [vmem:[#allocation2 + $0x18] sm:$0xf] %v247
    %280 = vst [vmem:[#allocation2 + $0x1c] sm:$0xf] %v248
    %281 = vst [vmem:[#allocation2 + $0x20] sm:$0xf] %v249
    %282 = vst [vmem:[#allocation2 + $0x24] sm:$0xf] %v250
    %283 = vst [vmem:[#allocation2 + $0x28] sm:$0xf] %v251
    %284 = vst [vmem:[#allocation2 + $0x2c] sm:$0xf] %v252
    %285 = vst [vmem:[#allocation2 + $0x30] sm:$0xf] %v253
    %286 = vst [vmem:[#allocation2 + $0x34] sm:$0xf] %v254
    %287 = vst [vmem:[#allocation2 + $0x38] sm:$0xf] %v255
    %288 = vst [vmem:[#allocation2 + $0x3c] sm:$0xf] %v256
    %v289 = vadd.f32 %v147, %v150
    %v290 = vadd.f32 %v289, %v155
    %v291 = vadd.f32 %v290, %v158
    %v292 = vadd.f32 %v291, %v163
    %v293 = vadd.f32 %v292, %v166
    %v294 = vadd.f32 %v293, %v171
    %v295 = vadd.f32 %v294, %v174
    %v296 = vadd.f32 %v295, %v179
    %v297 = vadd.f32 %v296, %v182
    %v298 = vadd.f32 %v297, %v187
    %v299 = vadd.f32 %v298, %v190
    %v300 = vadd.f32 %v299, %v195
    %v301 = vadd.f32 %v300, %v198
    %v302 = vadd.f32 %v301, %v203
    %v303 = vadd.f32 %v302, %v206
    %v304 = vrot.slane %v303, 4
    %v305 = vadd.f32 %v303, %v304
    %v306 = vrot.slane %v305, 2
    %v307 = vadd.f32 %v305, %v306
    %v308 = vrot.slane %v307, 1
    %v309 = vadd.f32 %v307, %v308
    %310 = vst [vmem:[#allocation4] sm:$0x1] %v309
    %v311 = vmul.f32 %v147, %v147
    %v312 = vmul.f32 %v150, %v150
    %v313 = vmul.f32 %v155, %v155
    %v314 = vmul.f32 %v158, %v158
    %v315 = vmul.f32 %v163, %v163
    %v316 = vmul.f32 %v166, %v166
    %v317 = vmul.f32 %v171, %v171
    %v318 = vmul.f32 %v174, %v174
    %v319 = vmul.f32 %v179, %v179
    %v320 = vmul.f32 %v182, %v182
    %v321 = vmul.f32 %v187, %v187
    %v322 = vmul.f32 %v190, %v190
    %v323 = vmul.f32 %v195, %v195
    %v324 = vmul.f32 %v198, %v198
    %v325 = vmul.f32 %v203, %v203
    %v326 = vmul.f32 %v206, %v206
    %v327 = vadd.f32 %v311, %v312
    %v328 = vadd.f32 %v327, %v313
    %v329 = vadd.f32 %v328, %v314
    %v330 = vadd.f32 %v329, %v315
    %v331 = vadd.f32 %v330, %v316
    %v332 = vadd.f32 %v331, %v317
    %v333 = vadd.f32 %v332, %v318
    %v334 = vadd.f32 %v333, %v319
    %v335 = vadd.f32 %v334, %v320
    %v336 = vadd.f32 %v335, %v321
    %v337 = vadd.f32 %v336, %v322
    %v338 = vadd.f32 %v337, %v323
    %v339 = vadd.f32 %v338, %v324
    %v340 = vadd.f32 %v339, %v325
    %v341 = vadd.f32 %v340, %v326
    %v342 = vrot.slane %v341, 4
    %v343 = vadd.f32 %v341, %v342
    %v344 = vrot.slane %v343, 2
    %v345 = vadd.f32 %v343, %v344
    %v346 = vrot.slane %v345, 1
    %v347 = vadd.f32 %v345, %v346
    %348 = vst [vmem:[#allocation4 + $0x1] sm:$0x1] %v347
    // Predicated region
    $region14: #{tpu_custom_call.1} parent=1 // pred_check
      _
    $region15: #{tpu_custom_call.1} parent=1 // pred_check_branch
      %350 = sbr.rel (0) target = $region17
    $region16: #{tpu_custom_call.1} parent=1 // pred_region
      %s352 = ssub.s32 1024, 1024
      %353 = vsyncadd [#allocation3], %s352
      %s354 = sshll.u32 [#allocation2], 4
      %s355 = int_to_ptr.vmem [resolvable:$true] %s354
      %360 = dma.vmem_to_hbm [thread:$0]  %s355, 1024, %s3, [#allocation3], 64, 64, 4
    $region17: #{tpu_custom_call.1} parent=1 // pred_fallthru
      _
    // Predicated region
    $region18: #{tpu_custom_call.1} parent=1 // pred_check
      _
    $region19: #{tpu_custom_call.1} parent=1 // pred_check_branch
      %362 = sbr.rel (0) target = $region21
    $region20: #{tpu_custom_call.1} parent=1 // pred_region
      %s364 = ssub.s32 128, 128
      %365 = vsyncadd [#allocation5], %s364
      %s367 = sshll.u32 [#allocation4], 4
      %s368 = int_to_ptr.vmem [resolvable:$true] %s367
      %370 = dma.vmem_to_hbm [thread:$0]  %s368, 128, %s4, [#allocation5]
    $region21: #{tpu_custom_call.1} parent=1 // pred_fallthru
      _
    // Predicated region
    $region22: #{tpu_custom_call.1} parent=1 // pred_check
      _
    $region23: #{tpu_custom_call.1} parent=1 // pred_check_branch
      %372 = sbr.rel (0) target = $region25
    $region24: #{tpu_custom_call.1} parent=1 // pred_region
      %373 = dma.done [#allocation3], 1024
    $region25: #{tpu_custom_call.1} parent=1 // pred_fallthru
      _
    // Predicated region
    $region26: #{tpu_custom_call.1} parent=1 // pred_check
      _
    $region27: #{tpu_custom_call.1} parent=1 // pred_check_branch
      %375 = sbr.rel (0) target = $region29
    $region28: #{tpu_custom_call.1} parent=1 // pred_region
      %376 = dma.done [#allocation5], 128
    $region29: #{tpu_custom_call.1} parent=1 // pred_fallthru
      _
    %377 = vsyncpa [#allocation3], 1
    %378 = vsyncpa [#allocation5], 1

</llo_original>
